<compile_context>
chip_gen: v7x
topology: tpu7x:2x2x1
jax: 0.10.0
libtpu: 0.0.40
codegen_flags: <defaults>
</compile_context>

<pallas_src>
import functools

import jax
import jax.numpy as jnp
from jax.experimental import pallas as pl
from jax.experimental.pallas import tpu as pltpu


_VMEM_LIMIT_BYTES = 32 * 1024 * 1024   # explicit scoped-VMEM budget (safe on v5e/v6e/v7x)
_TILE_BUDGET_BYTES = 2 * 1024 * 1024   # ~2 MiB per tile; double-buffered in+out << limit


def _pick_h_block(n_c, h, w, itemsize, budget_bytes=_TILE_BUDGET_BYTES):
    """Largest multiple-of-8 divisor of H whose input slab C*H_blk*W*itemsize
    stays under ~2 MiB; otherwise the full H extent (still correct)."""
    row_bytes = max(1, n_c * w * itemsize)
    max_rows = max(1, budget_bytes // row_bytes)
    if h <= max_rows:
        return h
    aligned_divisors = [d for d in range(8, h, 8) if h % d == 0 and d <= max_rows]
    if aligned_divisors:
        return max(aligned_divisors)
    return h


# ---------------------------------------------------------------------------
# NCHW -> NHWC fast path (perm == (0, 2, 3, 1))
# ---------------------------------------------------------------------------

def _nchw_to_nhwc_kernel(x_ref, o_ref):
    # x_ref: (C, H_blk, W)  -- batch dim squeezed away via block dim None.
    # o_ref: (H_blk, W, C)
    o_ref[...] = jnp.transpose(x_ref[...], (1, 2, 0))


def _nchw_to_nhwc(x):
    n, c, h, w = x.shape
    h_blk = _pick_h_block(c, h, w, jnp.dtype(x.dtype).itemsize)
    grid = (n, h // h_blk)
    return pl.pallas_call(
        _nchw_to_nhwc_kernel,
        out_shape=jax.ShapeDtypeStruct((n, h, w, c), x.dtype),
        grid=grid,
        in_specs=[pl.BlockSpec((None, c, h_blk, w),
                               lambda ni, hi: (ni, 0, hi, 0))],
        out_specs=pl.BlockSpec((None, h_blk, w, c),
                               lambda ni, hi: (ni, hi, 0, 0)),
        compiler_params=pltpu.CompilerParams(
            dimension_semantics=("parallel", "parallel"),
            vmem_limit_bytes=_VMEM_LIMIT_BYTES,
        ),
    )(x)


# ---------------------------------------------------------------------------
# Leading-dims-only permutation (last two dims untouched): pure-DMA copy.
# ---------------------------------------------------------------------------

def _copy_kernel(x_ref, o_ref):
    o_ref[...] = x_ref[...]


def _leading_perm_transpose(x, perm):
    ndim = x.ndim
    k = ndim - 2                      # number of leading (permuted) dims
    out_shape = tuple(x.shape[p] for p in perm)
    inv = [0] * ndim
    for a, d in enumerate(perm):
        inv[d] = a

    def in_index_map(*j):
        # j: grid indices over the OUTPUT leading dims.
        # x block index along x-dim d is the output grid index inv[d].
        return tuple(j[inv[d]] for d in range(k)) + (0, 0)

    def out_index_map(*j):
        return tuple(j) + (0, 0)

    d1, d2 = out_shape[-2], out_shape[-1]
    blk_lead = (None,) * k
    return pl.pallas_call(
        _copy_kernel,
        out_shape=jax.ShapeDtypeStruct(out_shape, x.dtype),
        grid=out_shape[:k],
        in_specs=[pl.BlockSpec(blk_lead + (d1, d2), in_index_map)],
        out_specs=pl.BlockSpec(blk_lead + (d1, d2), out_index_map),
        compiler_params=pltpu.CompilerParams(
            dimension_semantics=("parallel",) * k,
            vmem_limit_bytes=_VMEM_LIMIT_BYTES,
        ),
    )(x)


# ---------------------------------------------------------------------------
# Generic fallback (arbitrary perm / rank) -- whole-array blocks, small inputs.
# ---------------------------------------------------------------------------

def _generic_transpose_kernel(x_ref, o_ref, *, perm):
    o_ref[...] = jnp.transpose(x_ref[...], perm)


def _pallas_transpose_generic(x, perm):
    # TODO(synk): generalize the tiled/pipelined path to arbitrary perms that
    # move the last two dims; this fallback keeps whole-array blocks.
    ndim = x.ndim
    out_shape = tuple(x.shape[p] for p in perm)
    kernel = functools.partial(_generic_transpose_kernel, perm=perm)
    return pl.pallas_call(
        kernel,
        out_shape=jax.ShapeDtypeStruct(out_shape, x.dtype),
        grid=(1,),
        in_specs=[pl.BlockSpec(x.shape, lambda i: (0,) * ndim)],
        out_specs=pl.BlockSpec(out_shape, lambda i: (0,) * ndim),
        compiler_params=pltpu.CompilerParams(
            dimension_semantics=("arbitrary",),
            vmem_limit_bytes=_VMEM_LIMIT_BYTES,
        ),
    )(x)


def pallas_transpose(x, perm):
    """Equivalent of torch.Tensor.permute(*perm) implemented with Pallas TPU kernels."""
    perm = tuple(int(p) for p in perm)
    assert len(perm) == x.ndim and sorted(perm) == list(range(x.ndim))
    if perm == tuple(range(x.ndim)):
        return x
    if x.ndim == 4 and perm == (0, 2, 3, 1):
        return _nchw_to_nhwc(x)
    if x.ndim >= 3 and perm[-2:] == (x.ndim - 2, x.ndim - 1):
        return _leading_perm_transpose(x, perm)
    return _pallas_transpose_generic(x, perm)


if __name__ == "__main__":
    key = jax.random.PRNGKey(0)
    # Small NCHW input, consistent with a torch-style tensor.
    x = jax.random.normal(key, (2, 4, 16, 16), dtype=jnp.float32)

    # Primary config: NCHW -> NHWC (tiled, pipelined transpose path).
    perm = (0, 2, 3, 1)
    out = jax.block_until_ready(pallas_transpose(x, perm))
    ref = jnp.transpose(x, perm)
    assert out.shape == ref.shape, (out.shape, ref.shape)
    assert out.dtype == ref.dtype
    assert bool(jnp.array_equal(out, ref)), "Pallas NCHW->NHWC transpose mismatch"

    # Leading-dims-only permutation: pure-DMA rearrangement path.
    perm2 = (1, 0, 2, 3)
    out2 = jax.block_until_ready(pallas_transpose(x, perm2))
    ref2 = jnp.transpose(x, perm2)
    assert out2.shape == ref2.shape, (out2.shape, ref2.shape)
    assert bool(jnp.array_equal(out2, ref2)), "Pallas leading-perm transpose mismatch"

    print("KERNEL_OK")
</pallas_src>

<mosaic_0001>
module attributes {stable_mosaic.version = 11 : i64} {
  func.func @_nchw_to_nhwc_kernel(%arg0: i32, %arg1: i32, %arg2: memref<1x4x16x16xf32, #tpu.memory_space<vmem>>, %arg3: memref<1x16x16x4xf32, #tpu.memory_space<vmem>>) attributes {dimension_semantics = [#tpu.dimension_semantics<parallel>, #tpu.dimension_semantics<parallel>], iteration_bounds = array<i64: 2, 1>, scalar_prefetch = 0 : i64, scratch_operands = 0 : i64, tpu.core_type = #tpu.core_type<tc>, window_params = [{transform_indices = @transform_0, window_bounds = array<i64: 1, 4, 16, 16>}, {transform_indices = @transform_1, window_bounds = array<i64: 1, 16, 16, 4>}]} {
    %c0 = arith.constant 0 : index
    %c0_0 = arith.constant 0 : index
    %c0_1 = arith.constant 0 : index
    %c0_2 = arith.constant 0 : index
    %0 = vector.load %arg2[%c0, %c0_0, %c0_1, %c0_2] : memref<1x4x16x16xf32, #tpu.memory_space<vmem>>, vector<1x4x16x16xf32>
    %1 = vector.shape_cast %0 : vector<1x4x16x16xf32> to vector<4x16x16xf32>
    %2 = tpu.transpose %1, [1, 2, 0] : vector<4x16x16xf32> -> vector<16x16x4xf32>
    %c0_3 = arith.constant 0 : index
    %c0_4 = arith.constant 0 : index
    %c0_5 = arith.constant 0 : index
    %c0_6 = arith.constant 0 : index
    %3 = vector.load %arg3[%c0_3, %c0_4, %c0_5, %c0_6] : memref<1x16x16x4xf32, #tpu.memory_space<vmem>>, vector<1x16x16x4xf32>
    %4 = vector.shape_cast %3 : vector<1x16x16x4xf32> to vector<16x16x4xf32>
    %5 = vector.shape_cast %2 : vector<16x16x4xf32> to vector<1x16x16x4xf32>
    tpu.vector_store %arg3[%c0_3, %c0_4, %c0_5, %c0_6], %5 {strides = array<i32>} : memref<1x16x16x4xf32, #tpu.memory_space<vmem>>, vector<1x16x16x4xf32>,
    return
  }
  func.func @transform_0(%arg0: i32, %arg1: i32) -> (i32, i32, i32, i32) {
    %c0_i32 = arith.constant 0 : i32
    %c0_i32_0 = arith.constant 0 : i32
    %c0_i32_1 = arith.constant 0 : i32
    return %arg0, %c0_i32, %arg1, %c0_i32_0 : i32, i32, i32, i32
  }
  func.func @transform_1(%arg0: i32, %arg1: i32) -> (i32, i32, i32, i32) {
    %c0_i32 = arith.constant 0 : i32
    %c0_i32_0 = arith.constant 0 : i32
    %c0_i32_1 = arith.constant 0 : i32
    return %arg0, %arg1, %c0_i32, %c0_i32_0 : i32, i32, i32, i32
  }
}

</mosaic_0001>

<llo_original>
// kernel: tpu_custom_call.1
$region0: #{tpu_custom_call.1}
  #allocation0 [shape = 'u32[]', space=smem, size = 0x4, offset = 0x4, fixed_abs, tag = 'smem constant byte address 0x4 - core index']
  #allocation1 [shape = 'u32[144,128]{1,0:T(1,128)}', space=vmem, size = 0x12000, scoped, tag = 'internal scratch']
  %s0 = inlined_call_operand.hbm [shape: f32[2,4,16,16], index: 0, kind: input, shape index: {}]
  %s1 = inlined_call_operand.vmem [shape: f32[2,16,16,4], index: 1, kind: output, shape index: {}]
  %s2 = sld [smem:[#allocation0]]
  $region41: #{tpu_custom_call.1} parent=0
    _
  %s4 = ssub.s32 1, %s2
  %s5 = scalar_select 0, %s4, %s2
  $region1: #{tpu_custom_call.1} parent=0
    #allocation2 [shape = 'u8[65536]{0}', space=vmem, size = 0x10000, scoped, tag = 'input window, operand 0']
    #allocation3 [shape = 's32[2]{0}', space=sflag, size = 0x8, scoped, tag = 'scoped memory for tpu_custom_call.1']
    %6 = vsyncpa [#allocation3], 0
    %s7 = scalar_lea.sflag [#allocation3], 1
    %8 = vsyncpa %s7, 0
    loop: start=0, step=1, limit=4
    $region2: #{tpu_custom_call.1} parent=1 // loop_pre_header
      _
    $region3: #{tpu_custom_call.1} parent=1 // loop_header
      %s10 = sphi 0, %s14
      %p11 = scmp.ge.s32.totalorder %s10, 4
      %s17 = sphi 0, %s29
      %s18 = sphi 0, %s25
      %s19 = sphi 0, %s17
      %s20 = sphi 0, %s18
      %s21 = sphi 0, %s19
      %s22 = sphi 0, %s20
      %s34 = sphi 0, %s36
      %s37 = sphi 0, %s34
      %s38 = sphi 0, %s37
      %s54 = sphi 0, %s38
      %s62 = sphi 0, %s64
      %s65 = sphi 0, %s62
      %s66 = sphi 0, %s65
      %s82 = sphi 0, %s66
    $region4: #{tpu_custom_call.1} parent=1 // loop_header_branch
      %13 = sbr.rel (%p11) target = $region8
    $region5: #{tpu_custom_call.1} parent=1 // loop_body
      %s15 = ssub.s32 %s10, 1
      %s16 = ssub.s32 %s10, 2
      %s23 = sadd.s32 1, %s18
      %p24 = scmp.ge.s32.totalorder %s23, 1
      %s25 = scalar_select %p24, 0, %s23
      %s26 = sadd.s32 1, %s17
      %s27 = scalar_select %p24, %s26, %s17
      %p28 = scmp.ge.s32.totalorder %s27, 2
      %s29 = scalar_select %p28, 0, %s27
      %s30 = ssub.s32 %s17, %s29
      %s31 = ssub.s32 %s18, %s25
      %s32 = sor.u32 %s30, %s31
      %p33 = scmp.eq.s32.totalorder %s32, 0
      %s35 = sadd.s32 %s34, 1
      %s36 = scalar_select %p33, %s34, %s35
      %p39 = pneg %p33
      %p40 = scmp.eq.s32.totalorder %s10, 1
      %p41 = por %p39, %p40
      %p42 = scmp.ne.s32.totalorder %s34, %s37
      %p43 = scmp.eq.s32.totalorder %s10, 0
      %p44 = por %p42, %p43
      %p45 = scmp.ne.s32.totalorder %s34, %s37
      %p46 = scmp.eq.s32.totalorder %s15, 1
      %p47 = por %p45, %p46
      %p48 = scmp.ne.s32.totalorder %s37, %s38
      %p49 = scmp.eq.s32.totalorder %s15, 0
      %p50 = por %p48, %p49
      %p51 = scmp.ne.s32.totalorder %s37, %s38
      %p52 = scmp.eq.s32.totalorder %s16, 1
      %p53 = por %p51, %p52
      %p55 = scmp.ne.s32.totalorder %s38, %s54
      %p56 = scmp.eq.s32.totalorder %s16, 0
      %p57 = por %p55, %p56
      %s58 = ssub.s32 %s17, %s29
      %s59 = ssub.s32 %s18, %s25
      %s60 = sor.u32 %s58, %s59
      %p61 = scmp.eq.s32.totalorder %s60, 0
      %s63 = sadd.s32 %s62, 1
      %s64 = scalar_select %p61, %s62, %s63
      %p67 = pneg %p61
      %p68 = scmp.eq.s32.totalorder %s10, 1
      %p69 = por %p67, %p68
      %p70 = scmp.ne.s32.totalorder %s62, %s65
      %p71 = scmp.eq.s32.totalorder %s10, 0
      %p72 = por %p70, %p71
      %p73 = scmp.ne.s32.totalorder %s62, %s65
      %p74 = scmp.eq.s32.totalorder %s15, 1
      %p75 = por %p73, %p74
      %p76 = scmp.ne.s32.totalorder %s65, %s66
      %p77 = scmp.eq.s32.totalorder %s15, 0
      %p78 = por %p76, %p77
      %p79 = scmp.ne.s32.totalorder %s65, %s66
      %p80 = scmp.eq.s32.totalorder %s16, 1
      %p81 = por %p79, %p80
      %p83 = scmp.ne.s32.totalorder %s66, %s82
      %p84 = scmp.eq.s32.totalorder %s16, 0
      %p85 = por %p83, %p84
      %p86 = scmp.le.s32.totalorder 1, %s10
      %p87 = scmp.lt.s32.totalorder %s10, 3
      %p88 = pnand %p86, %p87
      %p89 = pneg %p88
      // Predicated region
      $region9: #{tpu_custom_call.1} parent=5 // pred_check
        _
      $region10: #{tpu_custom_call.1} parent=5 // pred_check_branch
        %91 = sbr.rel (%p88) target = $region12
      $region11: #{tpu_custom_call.1} parent=5 // pred_region
        %s92 = ssub.s32 %s10, 1
      $region12: #{tpu_custom_call.1} parent=5 // pred_fallthru
        _
      %p93 = scmp.lt.s32.totalorder %s10, 2
      // Predicated region
      $region13: #{tpu_custom_call.1} parent=5 // pred_check
        %p94 = pneg %p93
      $region14: #{tpu_custom_call.1} parent=5 // pred_check_branch
        %96 = sbr.rel (%p94) target = $region16
      $region15: #{tpu_custom_call.1} parent=5 // pred_region
        // Predicated region
        $region17: #{tpu_custom_call.1} parent=15 // pred_check
          %p97 = pneg %p44
        $region18: #{tpu_custom_call.1} parent=15 // pred_check_branch
          %99 = sbr.rel (%p97) target = $region20
        $region19: #{tpu_custom_call.1} parent=15 // pred_region
          %s100 = sand.u32 %s34, 1
          %s101 = scalar_lea.sflag [#allocation3], %s100
          %s102 = sand.u32 %s34, 1
          %s103 = smul.addr %s102, 64
          %s104 = scalar_lea.vmem [#allocation2], %s103
          %s105 = smul.u32 2, %s18
          %s107 = ssub.s32 1024, 1024
          %108 = vsyncadd %s101, %s107
          %s109 = smul.addr %s17, 8
          %s110 = sadd.s32 %s105, %s109
          %s111 = smul.addr %s110, 128
          %s112 = scalar_lea.hbm %s0, %s111
          %s113 = sshll.u32 %s104, 4
          %s114 = int_to_ptr.vmem [resolvable:$true] %s113
          %119 = dma.hbm_to_vmem [thread:$0]  %s112, 1024, %s114, %s101, 128, 128, 8
        $region20: #{tpu_custom_call.1} parent=15 // pred_fallthru
          _
      $region16: #{tpu_custom_call.1} parent=5 // pred_fallthru
        _
      %p120 = scmp.le.s32.totalorder 1, %s10
      %p121 = scmp.lt.s32.totalorder %s10, 3
      %p122 = pnand %p120, %p121
      %p123 = pneg %p122
      // Predicated region
      $region21: #{tpu_custom_call.1} parent=5 // pred_check
        _
      $region22: #{tpu_custom_call.1} parent=5 // pred_check_branch
        %125 = sbr.rel (%p122) target = $region24
      $region23: #{tpu_custom_call.1} parent=5 // pred_region
        %s126 = ssub.s32 %s10, 1
        %s127 = sand.u32 %s37, 1
        %s128 = scalar_lea.sflag [#allocation3], %s127
        %s129 = sand.u32 %s37, 1
        %s130 = smul.addr %s129, 64
        %s131 = scalar_lea.vmem [#allocation2], %s130
        // Predicated region
        $region25: #{tpu_custom_call.1} parent=23 // pred_check
          %p132 = pneg %p50
        $region26: #{tpu_custom_call.1} parent=23 // pred_check_branch
          %134 = sbr.rel (%p132) target = $region28
        $region27: #{tpu_custom_call.1} parent=23 // pred_region
          %135 = dma.done %s128, 1024
        $region28: #{tpu_custom_call.1} parent=23 // pred_fallthru
          _
        %s136 = sand.u32 %s37, 1
        %s137 = scalar_lea.sflag [#allocation3], %s136
        %s138 = sand.u32 %s37, 1
        %s139 = smul.addr %s138, 64
        %s140 = scalar_lea.vmem [#allocation2], %s139
        %p141 = pneg %p50
        %p142 = pneg %p47
        %p143 = pneg %p78
        %p144 = pneg %p75
        %s145 = smul.u32 16, %s20
        %p146 = scmp.lt.s32.totalorder %s19, 1
        %s147 = scalar_select %p146, %s19, 1
        %p148 = scmp.lt.s32.totalorder %s145, 15
        %s149 = scalar_select %p148, %s145, 15
        %s150 = smul.addr %s149, 2
        %s151 = smul.addr %s147, 32
        %s152 = sadd.s32 %s150, %s151
        %s153 = smul.addr %s152, 8
        %s154 = scalar_lea.vmem %s1, %s153
        %s155 = smul.u32 2, %s20
        %s156 = smul.u32 16, %s20
        %p157 = scmp.lt.s32.totalorder %s19, 1
        %s158 = scalar_select %p157, %s19, 1
        %p159 = scmp.lt.s32.totalorder %s156, 15
        %s160 = scalar_select %p159, %s156, 15
        %s161 = smul.addr %s160, 2
        %s162 = smul.addr %s158, 32
        %s163 = sadd.s32 %s161, %s162
        %s164 = smul.addr %s163, 8
        %s165 = scalar_lea.vmem %s1, %s164
        %s166 = smul.u32 16, %s20
        %v167 = vld [vmem:[%s131] sm:$0xff]
        %v168 = vld [vmem:[%s131 + $0x8] sm:$0xff]
        %v169 = vld [vmem:[%s131 + $0x10] sm:$0xff]
        %v170 = vld [vmem:[%s131 + $0x18] sm:$0xff]
        %v171 = vld [vmem:[%s131 + $0x20] sm:$0xff]
        %v172 = vld [vmem:[%s131 + $0x28] sm:$0xff]
        %v173 = vld [vmem:[%s131 + $0x30] sm:$0xff]
        %v174 = vld [vmem:[%s131 + $0x38] sm:$0xff]
        %175 = vxpose.xlu0.b32.start [1/16] %v167, 128
        %176 = vxpose.xlu0.b32.cont [2/16] %v168, 128
        %177 = vxpose.xlu0.b32.cont [3/16] 0.0, 128
        %178 = vxpose.xlu0.b32.cont [4/16] 0.0, 128
        %179 = vxpose.xlu0.b32.cont [5/16] 0.0, 128
        %180 = vxpose.xlu0.b32.cont [6/16] 0.0, 128
        %181 = vxpose.xlu0.b32.cont [7/16] 0.0, 128
        %182 = vxpose.xlu0.b32.cont [8/16] 0.0, 128
        %183 = vxpose.xlu0.b32.cont [9/16] 0.0, 128
        %184 = vxpose.xlu0.b32.cont [10/16] 0.0, 128
        %185 = vxpose.xlu0.b32.cont [11/16] 0.0, 128
        %186 = vxpose.xlu0.b32.cont [12/16] 0.0, 128
        %187 = vxpose.xlu0.b32.cont [13/16] 0.0, 128
        %188 = vxpose.xlu0.b32.cont [14/16] 0.0, 128
        %189 = vxpose.xlu0.b32.cont [15/16] 0.0, 128
        %190 = vxpose.xlu0.b32.end [16/16] 0.0, 128
        %v191 = vpop.trf.xlu0
        %v192 = vpop.trf.xlu0
        %v193 = vpop.trf.xlu0
        %v194 = vpop.trf.xlu0
        %v195 = vpop.trf.xlu0
        %v196 = vpop.trf.xlu0
        %v197 = vpop.trf.xlu0
        %v198 = vpop.trf.xlu0
        %v199 = vpop.trf.xlu0
        %v200 = vpop.trf.xlu0
        %v201 = vpop.trf.xlu0
        %v202 = vpop.trf.xlu0
        %v203 = vpop.trf.xlu0
        %v204 = vpop.trf.xlu0
        %v205 = vpop.trf.xlu0
        %v206 = vpop.trf.xlu0
        %207 = vxpose.xlu0.b32.start [1/16] %v169, 128
        %208 = vxpose.xlu0.b32.cont [2/16] %v170, 128
        %209 = vxpose.xlu0.b32.cont [3/16] 0.0, 128
        %210 = vxpose.xlu0.b32.cont [4/16] 0.0, 128
        %211 = vxpose.xlu0.b32.cont [5/16] 0.0, 128
        %212 = vxpose.xlu0.b32.cont [6/16] 0.0, 128
        %213 = vxpose.xlu0.b32.cont [7/16] 0.0, 128
        %214 = vxpose.xlu0.b32.cont [8/16] 0.0, 128
        %215 = vxpose.xlu0.b32.cont [9/16] 0.0, 128
        %216 = vxpose.xlu0.b32.cont [10/16] 0.0, 128
        %217 = vxpose.xlu0.b32.cont [11/16] 0.0, 128
        %218 = vxpose.xlu0.b32.cont [12/16] 0.0, 128
        %219 = vxpose.xlu0.b32.cont [13/16] 0.0, 128
        %220 = vxpose.xlu0.b32.cont [14/16] 0.0, 128
        %221 = vxpose.xlu0.b32.cont [15/16] 0.0, 128
        %222 = vxpose.xlu0.b32.end [16/16] 0.0, 128
        %v223 = vpop.trf.xlu0
        %v224 = vpop.trf.xlu0
        %v225 = vpop.trf.xlu0
        %v226 = vpop.trf.xlu0
        %v227 = vpop.trf.xlu0
        %v228 = vpop.trf.xlu0
        %v229 = vpop.trf.xlu0
        %v230 = vpop.trf.xlu0
        %v231 = vpop.trf.xlu0
        %v232 = vpop.trf.xlu0
        %v233 = vpop.trf.xlu0
        %v234 = vpop.trf.xlu0
        %v235 = vpop.trf.xlu0
        %v236 = vpop.trf.xlu0
        %v237 = vpop.trf.xlu0
        %v238 = vpop.trf.xlu0
        %239 = vxpose.xlu0.b32.start [1/16] %v171, 128
        %240 = vxpose.xlu0.b32.cont [2/16] %v172, 128
        %241 = vxpose.xlu0.b32.cont [3/16] 0.0, 128
        %242 = vxpose.xlu0.b32.cont [4/16] 0.0, 128
        %243 = vxpose.xlu0.b32.cont [5/16] 0.0, 128
        %244 = vxpose.xlu0.b32.cont [6/16] 0.0, 128
        %245 = vxpose.xlu0.b32.cont [7/16] 0.0, 128
        %246 = vxpose.xlu0.b32.cont [8/16] 0.0, 128
        %247 = vxpose.xlu0.b32.cont [9/16] 0.0, 128
        %248 = vxpose.xlu0.b32.cont [10/16] 0.0, 128
        %249 = vxpose.xlu0.b32.cont [11/16] 0.0, 128
        %250 = vxpose.xlu0.b32.cont [12/16] 0.0, 128
        %251 = vxpose.xlu0.b32.cont [13/16] 0.0, 128
        %252 = vxpose.xlu0.b32.cont [14/16] 0.0, 128
        %253 = vxpose.xlu0.b32.cont [15/16] 0.0, 128
        %254 = vxpose.xlu0.b32.end [16/16] 0.0, 128
        %v255 = vpop.trf.xlu0
        %v256 = vpop.trf.xlu0
        %v257 = vpop.trf.xlu0
        %v258 = vpop.trf.xlu0
        %v259 = vpop.trf.xlu0
        %v260 = vpop.trf.xlu0
        %v261 = vpop.trf.xlu0
        %v262 = vpop.trf.xlu0
        %v263 = vpop.trf.xlu0
        %v264 = vpop.trf.xlu0
        %v265 = vpop.trf.xlu0
        %v266 = vpop.trf.xlu0
        %v267 = vpop.trf.xlu0
        %v268 = vpop.trf.xlu0
        %v269 = vpop.trf.xlu0
        %v270 = vpop.trf.xlu0
        %271 = vxpose.xlu0.b32.start [1/16] %v173, 128
        %272 = vxpose.xlu0.b32.cont [2/16] %v174, 128
        %273 = vxpose.xlu0.b32.cont [3/16] 0.0, 128
        %274 = vxpose.xlu0.b32.cont [4/16] 0.0, 128
        %275 = vxpose.xlu0.b32.cont [5/16] 0.0, 128
        %276 = vxpose.xlu0.b32.cont [6/16] 0.0, 128
        %277 = vxpose.xlu0.b32.cont [7/16] 0.0, 128
        %278 = vxpose.xlu0.b32.cont [8/16] 0.0, 128
        %279 = vxpose.xlu0.b32.cont [9/16] 0.0, 128
        %280 = vxpose.xlu0.b32.cont [10/16] 0.0, 128
        %281 = vxpose.xlu0.b32.cont [11/16] 0.0, 128
        %282 = vxpose.xlu0.b32.cont [12/16] 0.0, 128
        %283 = vxpose.xlu0.b32.cont [13/16] 0.0, 128
        %284 = vxpose.xlu0.b32.cont [14/16] 0.0, 128
        %285 = vxpose.xlu0.b32.cont [15/16] 0.0, 128
        %286 = vxpose.xlu0.b32.end [16/16] 0.0, 128
        %v287 = vpop.trf.xlu0
        %v288 = vpop.trf.xlu0
        %v289 = vpop.trf.xlu0
        %v290 = vpop.trf.xlu0
        %v291 = vpop.trf.xlu0
        %v292 = vpop.trf.xlu0
        %v293 = vpop.trf.xlu0
        %v294 = vpop.trf.xlu0
        %v295 = vpop.trf.xlu0
        %v296 = vpop.trf.xlu0
        %v297 = vpop.trf.xlu0
        %v298 = vpop.trf.xlu0
        %v299 = vpop.trf.xlu0
        %v300 = vpop.trf.xlu0
        %v301 = vpop.trf.xlu0
        %v302 = vpop.trf.xlu0
        %v303 = vcombine.low %v191, %v255
        %v304 = vcombine.high %v191, %v255
        %v306 = vunpack.c.l.s4 1983009808
        %v307 = vunpack.c.0.s8 %v306
        %v308 = vlaneseq
        %v309 = vshrl.u32 %v308, 7
        %v310 = vsub.s32 %v307, %v309
        %v311 = vrot.slane %v303, %v310
        %v313 = vunpack.c.l.s4 1983009808
        %v314 = vunpack.c.0.s8 %v313
        %v315 = vlaneseq
        %v316 = vshrl.u32 %v315, 7
        %v317 = vsub.s32 %v314, %v316
        %v318 = vrot.slane %v304, %v317
        %v319 = vcombine.low %v223, %v287
        %v320 = vcombine.high %v223, %v287
        %v322 = vunpack.c.l.s4 1983009808
        %v323 = vunpack.c.0.s8 %v322
        %v324 = vlaneseq
        %v325 = vshrl.u32 %v324, 7
        %v326 = vsub.s32 %v323, %v325
        %v327 = vrot.slane %v319, %v326
        %v329 = vunpack.c.l.s4 1983009808
        %v330 = vunpack.c.0.s8 %v329
        %v331 = vlaneseq
        %v332 = vshrl.u32 %v331, 7
        %v333 = vsub.s32 %v330, %v332
        %v334 = vrot.slane %v320, %v333
        %v335 = vcombine.low %v311, %v327
        %v336 = vcombine.high %v311, %v327
        %v338 = vunpack.c.l.s4 1934713408
        %v339 = vunpack.c.0.s8 %v338
        %v340 = vlaneseq
        %v341 = vshrl.u32 %v340, 7
        %v342 = vsub.s32 %v339, %v341
        %v343 = vrot.slane %v335, %v342
        %v345 = vunpack.c.l.s4 1934713408
        %v346 = vunpack.c.0.s8 %v345
        %v347 = vlaneseq
        %v348 = vshrl.u32 %v347, 7
        %v349 = vsub.s32 %v346, %v348
        %v350 = vrot.slane %v336, %v349
        %v351 = vcombine.low %v318, %v334
        %v352 = vcombine.high %v318, %v334
        %v354 = vunpack.c.l.s4 1934713408
        %v355 = vunpack.c.0.s8 %v354
        %v356 = vlaneseq
        %v357 = vshrl.u32 %v356, 7
        %v358 = vsub.s32 %v355, %v357
        %v359 = vrot.slane %v351, %v358
        %v361 = vunpack.c.l.s4 1934713408
        %v362 = vunpack.c.0.s8 %v361
        %v363 = vlaneseq
        %v364 = vshrl.u32 %v363, 7
        %v365 = vsub.s32 %v362, %v364
        %v366 = vrot.slane %v352, %v365
        %v367 = vcombine.high %v343, 0.0
        %v368 = vcombine.high %v350, 0.0
        %v369 = vcombine.high %v359, 0.0
        %v370 = vcombine.high %v366, 0.0
        %v371 = vcombine.low %v192, %v256
        %v372 = vcombine.high %v192, %v256
        %v374 = vunpack.c.l.s4 1983009808
        %v375 = vunpack.c.0.s8 %v374
        %v376 = vlaneseq
        %v377 = vshrl.u32 %v376, 7
        %v378 = vsub.s32 %v375, %v377
        %v379 = vrot.slane %v371, %v378
        %v381 = vunpack.c.l.s4 1983009808
        %v382 = vunpack.c.0.s8 %v381
        %v383 = vlaneseq
        %v384 = vshrl.u32 %v383, 7
        %v385 = vsub.s32 %v382, %v384
        %v386 = vrot.slane %v372, %v385
        %v387 = vcombine.low %v224, %v288
        %v388 = vcombine.high %v224, %v288
        %v390 = vunpack.c.l.s4 1983009808
        %v391 = vunpack.c.0.s8 %v390
        %v392 = vlaneseq
        %v393 = vshrl.u32 %v392, 7
        %v394 = vsub.s32 %v391, %v393
        %v395 = vrot.slane %v387, %v394
        %v397 = vunpack.c.l.s4 1983009808
        %v398 = vunpack.c.0.s8 %v397
        %v399 = vlaneseq
        %v400 = vshrl.u32 %v399, 7
        %v401 = vsub.s32 %v398, %v400
        %v402 = vrot.slane %v388, %v401
        %v403 = vcombine.low %v379, %v395
        %v404 = vcombine.high %v379, %v395
        %v406 = vunpack.c.l.s4 1934713408
        %v407 = vunpack.c.0.s8 %v406
        %v408 = vlaneseq
        %v409 = vshrl.u32 %v408, 7
        %v410 = vsub.s32 %v407, %v409
        %v411 = vrot.slane %v403, %v410
        %v413 = vunpack.c.l.s4 1934713408
        %v414 = vunpack.c.0.s8 %v413
        %v415 = vlaneseq
        %v416 = vshrl.u32 %v415, 7
        %v417 = vsub.s32 %v414, %v416
        %v418 = vrot.slane %v404, %v417
        %v419 = vcombine.low %v386, %v402
        %v420 = vcombine.high %v386, %v402
        %v422 = vunpack.c.l.s4 1934713408
        %v423 = vunpack.c.0.s8 %v422
        %v424 = vlaneseq
        %v425 = vshrl.u32 %v424, 7
        %v426 = vsub.s32 %v423, %v425
        %v427 = vrot.slane %v419, %v426
        %v429 = vunpack.c.l.s4 1934713408
        %v430 = vunpack.c.0.s8 %v429
        %v431 = vlaneseq
        %v432 = vshrl.u32 %v431, 7
        %v433 = vsub.s32 %v430, %v432
        %v434 = vrot.slane %v420, %v433
        %v435 = vcombine.high %v411, 0.0
        %v436 = vcombine.high %v418, 0.0
        %v437 = vcombine.high %v427, 0.0
        %v438 = vcombine.high %v434, 0.0
        %439 = vxpose.xlu0.b32.start [1/16] %v343, 128
        %440 = vxpose.xlu0.b32.cont [2/16] 0.0, 128
        %441 = vxpose.xlu0.b32.cont [3/16] 0.0, 128
        %442 = vxpose.xlu0.b32.cont [4/16] 0.0, 128
        %443 = vxpose.xlu0.b32.cont [5/16] 0.0, 128
        %444 = vxpose.xlu0.b32.cont [6/16] 0.0, 128
        %445 = vxpose.xlu0.b32.cont [7/16] 0.0, 128
        %446 = vxpose.xlu0.b32.cont [8/16] 0.0, 128
        %447 = vxpose.xlu0.b32.cont [9/16] 0.0, 128
        %448 = vxpose.xlu0.b32.cont [10/16] 0.0, 128
        %449 = vxpose.xlu0.b32.cont [11/16] 0.0, 128
        %450 = vxpose.xlu0.b32.cont [12/16] 0.0, 128
        %451 = vxpose.xlu0.b32.cont [13/16] 0.0, 128
        %452 = vxpose.xlu0.b32.cont [14/16] 0.0, 128
        %453 = vxpose.xlu0.b32.cont [15/16] 0.0, 128
        %454 = vxpose.xlu0.b32.end [16/16] 0.0, 128
        %v455 = vpop.trf.xlu0
        %v456 = vpop.trf.xlu0
        %v457 = vpop.trf.xlu0
        %v458 = vpop.trf.xlu0
        %v459 = vpop.trf.xlu0
        %v460 = vpop.trf.xlu0
        %v461 = vpop.trf.xlu0
        %v462 = vpop.trf.xlu0
        %v463 = vpop.trf.xlu0
        %v464 = vpop.trf.xlu0
        %v465 = vpop.trf.xlu0
        %v466 = vpop.trf.xlu0
        %v467 = vpop.trf.xlu0
        %v468 = vpop.trf.xlu0
        %v469 = vpop.trf.xlu0
        %v470 = vpop.trf.xlu0
        %471 = vxpose.xlu0.b32.start [1/16] %v367, 128
        %472 = vxpose.xlu0.b32.cont [2/16] 0.0, 128
        %473 = vxpose.xlu0.b32.cont [3/16] 0.0, 128
        %474 = vxpose.xlu0.b32.cont [4/16] 0.0, 128
        %475 = vxpose.xlu0.b32.cont [5/16] 0.0, 128
        %476 = vxpose.xlu0.b32.cont [6/16] 0.0, 128
        %477 = vxpose.xlu0.b32.cont [7/16] 0.0, 128
        %478 = vxpose.xlu0.b32.cont [8/16] 0.0, 128
        %479 = vxpose.xlu0.b32.cont [9/16] 0.0, 128
        %480 = vxpose.xlu0.b32.cont [10/16] 0.0, 128
        %481 = vxpose.xlu0.b32.cont [11/16] 0.0, 128
        %482 = vxpose.xlu0.b32.cont [12/16] 0.0, 128
        %483 = vxpose.xlu0.b32.cont [13/16] 0.0, 128
        %484 = vxpose.xlu0.b32.cont [14/16] 0.0, 128
        %485 = vxpose.xlu0.b32.cont [15/16] 0.0, 128
        %486 = vxpose.xlu0.b32.end [16/16] 0.0, 128
        %v487 = vpop.trf.xlu0
        %v488 = vpop.trf.xlu0
        %v489 = vpop.trf.xlu0
        %v490 = vpop.trf.xlu0
        %v491 = vpop.trf.xlu0
        %v492 = vpop.trf.xlu0
        %v493 = vpop.trf.xlu0
        %v494 = vpop.trf.xlu0
        %v495 = vpop.trf.xlu0
        %v496 = vpop.trf.xlu0
        %v497 = vpop.trf.xlu0
        %v498 = vpop.trf.xlu0
        %v499 = vpop.trf.xlu0
        %v500 = vpop.trf.xlu0
        %v501 = vpop.trf.xlu0
        %v502 = vpop.trf.xlu0
        %503 = vxpose.xlu0.b32.start [1/16] %v350, 128
        %504 = vxpose.xlu0.b32.cont [2/16] 0.0, 128
        %505 = vxpose.xlu0.b32.cont [3/16] 0.0, 128
        %506 = vxpose.xlu0.b32.cont [4/16] 0.0, 128
        %507 = vxpose.xlu0.b32.cont [5/16] 0.0, 128
        %508 = vxpose.xlu0.b32.cont [6/16] 0.0, 128
        %509 = vxpose.xlu0.b32.cont [7/16] 0.0, 128
        %510 = vxpose.xlu0.b32.cont [8/16] 0.0, 128
        %511 = vxpose.xlu0.b32.cont [9/16] 0.0, 128
        %512 = vxpose.xlu0.b32.cont [10/16] 0.0, 128
        %513 = vxpose.xlu0.b32.cont [11/16] 0.0, 128
        %514 = vxpose.xlu0.b32.cont [12/16] 0.0, 128
        %515 = vxpose.xlu0.b32.cont [13/16] 0.0, 128
        %516 = vxpose.xlu0.b32.cont [14/16] 0.0, 128
        %517 = vxpose.xlu0.b32.cont [15/16] 0.0, 128
        %518 = vxpose.xlu0.b32.end [16/16] 0.0, 128
        %v519 = vpop.trf.xlu0
        %v520 = vpop.trf.xlu0
        %v521 = vpop.trf.xlu0
        %v522 = vpop.trf.xlu0
        %v523 = vpop.trf.xlu0
        %v524 = vpop.trf.xlu0
        %v525 = vpop.trf.xlu0
        %v526 = vpop.trf.xlu0
        %v527 = vpop.trf.xlu0
        %v528 = vpop.trf.xlu0
        %v529 = vpop.trf.xlu0
        %v530 = vpop.trf.xlu0
        %v531 = vpop.trf.xlu0
        %v532 = vpop.trf.xlu0
        %v533 = vpop.trf.xlu0
        %v534 = vpop.trf.xlu0
        %535 = vxpose.xlu0.b32.start [1/16] %v368, 128
        %536 = vxpose.xlu0.b32.cont [2/16] 0.0, 128
        %537 = vxpose.xlu0.b32.cont [3/16] 0.0, 128
        %538 = vxpose.xlu0.b32.cont [4/16] 0.0, 128
        %539 = vxpose.xlu0.b32.cont [5/16] 0.0, 128
        %540 = vxpose.xlu0.b32.cont [6/16] 0.0, 128
        %541 = vxpose.xlu0.b32.cont [7/16] 0.0, 128
        %542 = vxpose.xlu0.b32.cont [8/16] 0.0, 128
        %543 = vxpose.xlu0.b32.cont [9/16] 0.0, 128
        %544 = vxpose.xlu0.b32.cont [10/16] 0.0, 128
        %545 = vxpose.xlu0.b32.cont [11/16] 0.0, 128
        %546 = vxpose.xlu0.b32.cont [12/16] 0.0, 128
        %547 = vxpose.xlu0.b32.cont [13/16] 0.0, 128
        %548 = vxpose.xlu0.b32.cont [14/16] 0.0, 128
        %549 = vxpose.xlu0.b32.cont [15/16] 0.0, 128
        %550 = vxpose.xlu0.b32.end [16/16] 0.0, 128
        %v551 = vpop.trf.xlu0
        %v552 = vpop.trf.xlu0
        %v553 = vpop.trf.xlu0
        %v554 = vpop.trf.xlu0
        %v555 = vpop.trf.xlu0
        %v556 = vpop.trf.xlu0
        %v557 = vpop.trf.xlu0
        %v558 = vpop.trf.xlu0
        %v559 = vpop.trf.xlu0
        %v560 = vpop.trf.xlu0
        %v561 = vpop.trf.xlu0
        %v562 = vpop.trf.xlu0
        %v563 = vpop.trf.xlu0
        %v564 = vpop.trf.xlu0
        %v565 = vpop.trf.xlu0
        %v566 = vpop.trf.xlu0
        %567 = vxpose.xlu0.b32.start [1/16] %v359, 128
        %568 = vxpose.xlu0.b32.cont [2/16] 0.0, 128
        %569 = vxpose.xlu0.b32.cont [3/16] 0.0, 128
        %570 = vxpose.xlu0.b32.cont [4/16] 0.0, 128
        %571 = vxpose.xlu0.b32.cont [5/16] 0.0, 128
        %572 = vxpose.xlu0.b32.cont [6/16] 0.0, 128
        %573 = vxpose.xlu0.b32.cont [7/16] 0.0, 128
        %574 = vxpose.xlu0.b32.cont [8/16] 0.0, 128
        %575 = vxpose.xlu0.b32.cont [9/16] 0.0, 128
        %576 = vxpose.xlu0.b32.cont [10/16] 0.0, 128
        %577 = vxpose.xlu0.b32.cont [11/16] 0.0, 128
        %578 = vxpose.xlu0.b32.cont [12/16] 0.0, 128
        %579 = vxpose.xlu0.b32.cont [13/16] 0.0, 128
        %580 = vxpose.xlu0.b32.cont [14/16] 0.0, 128
        %581 = vxpose.xlu0.b32.cont [15/16] 0.0, 128
        %582 = vxpose.xlu0.b32.end [16/16] 0.0, 128
        %v583 = vpop.trf.xlu0
        %v584 = vpop.trf.xlu0
        %v585 = vpop.trf.xlu0
        %v586 = vpop.trf.xlu0
        %v587 = vpop.trf.xlu0
        %v588 = vpop.trf.xlu0
        %v589 = vpop.trf.xlu0
        %v590 = vpop.trf.xlu0
        %v591 = vpop.trf.xlu0
        %v592 = vpop.trf.xlu0
        %v593 = vpop.trf.xlu0
        %v594 = vpop.trf.xlu0
        %v595 = vpop.trf.xlu0
        %v596 = vpop.trf.xlu0
        %v597 = vpop.trf.xlu0
        %v598 = vpop.trf.xlu0
        %599 = vxpose.xlu0.b32.start [1/16] %v369, 128
        %600 = vxpose.xlu0.b32.cont [2/16] 0.0, 128
        %601 = vxpose.xlu0.b32.cont [3/16] 0.0, 128
        %602 = vxpose.xlu0.b32.cont [4/16] 0.0, 128
        %603 = vxpose.xlu0.b32.cont [5/16] 0.0, 128
        %604 = vxpose.xlu0.b32.cont [6/16] 0.0, 128
        %605 = vxpose.xlu0.b32.cont [7/16] 0.0, 128
        %606 = vxpose.xlu0.b32.cont [8/16] 0.0, 128
        %607 = vxpose.xlu0.b32.cont [9/16] 0.0, 128
        %608 = vxpose.xlu0.b32.cont [10/16] 0.0, 128
        %609 = vxpose.xlu0.b32.cont [11/16] 0.0, 128
        %610 = vxpose.xlu0.b32.cont [12/16] 0.0, 128
        %611 = vxpose.xlu0.b32.cont [13/16] 0.0, 128
        %612 = vxpose.xlu0.b32.cont [14/16] 0.0, 128
        %613 = vxpose.xlu0.b32.cont [15/16] 0.0, 128
        %614 = vxpose.xlu0.b32.end [16/16] 0.0, 128
        %v615 = vpop.trf.xlu0
        %v616 = vpop.trf.xlu0
        %v617 = vpop.trf.xlu0
        %v618 = vpop.trf.xlu0
        %v619 = vpop.trf.xlu0
        %v620 = vpop.trf.xlu0
        %v621 = vpop.trf.xlu0
        %v622 = vpop.trf.xlu0
        %v623 = vpop.trf.xlu0
        %v624 = vpop.trf.xlu0
        %v625 = vpop.trf.xlu0
        %v626 = vpop.trf.xlu0
        %v627 = vpop.trf.xlu0
        %v628 = vpop.trf.xlu0
        %v629 = vpop.trf.xlu0
        %v630 = vpop.trf.xlu0
        %631 = vxpose.xlu0.b32.start [1/16] %v366, 128
        %632 = vxpose.xlu0.b32.cont [2/16] 0.0, 128
        %633 = vxpose.xlu0.b32.cont [3/16] 0.0, 128
        %634 = vxpose.xlu0.b32.cont [4/16] 0.0, 128
        %635 = vxpose.xlu0.b32.cont [5/16] 0.0, 128
        %636 = vxpose.xlu0.b32.cont [6/16] 0.0, 128
        %637 = vxpose.xlu0.b32.cont [7/16] 0.0, 128
        %638 = vxpose.xlu0.b32.cont [8/16] 0.0, 128
        %639 = vxpose.xlu0.b32.cont [9/16] 0.0, 128
        %640 = vxpose.xlu0.b32.cont [10/16] 0.0, 128
        %641 = vxpose.xlu0.b32.cont [11/16] 0.0, 128
        %642 = vxpose.xlu0.b32.cont [12/16] 0.0, 128
        %643 = vxpose.xlu0.b32.cont [13/16] 0.0, 128
        %644 = vxpose.xlu0.b32.cont [14/16] 0.0, 128
        %645 = vxpose.xlu0.b32.cont [15/16] 0.0, 128
        %646 = vxpose.xlu0.b32.end [16/16] 0.0, 128
        %v647 = vpop.trf.xlu0
        %v648 = vpop.trf.xlu0
        %v649 = vpop.trf.xlu0
        %v650 = vpop.trf.xlu0
        %v651 = vpop.trf.xlu0
        %v652 = vpop.trf.xlu0
        %v653 = vpop.trf.xlu0
        %v654 = vpop.trf.xlu0
        %v655 = vpop.trf.xlu0
        %v656 = vpop.trf.xlu0
        %v657 = vpop.trf.xlu0
        %v658 = vpop.trf.xlu0
        %v659 = vpop.trf.xlu0
        %v660 = vpop.trf.xlu0
        %v661 = vpop.trf.xlu0
        %v662 = vpop.trf.xlu0
        %663 = vxpose.xlu0.b32.start [1/16] %v370, 128
        %664 = vxpose.xlu0.b32.cont [2/16] 0.0, 128
        %665 = vxpose.xlu0.b32.cont [3/16] 0.0, 128
        %666 = vxpose.xlu0.b32.cont [4/16] 0.0, 128
        %667 = vxpose.xlu0.b32.cont [5/16] 0.0, 128
        %668 = vxpose.xlu0.b32.cont [6/16] 0.0, 128
        %669 = vxpose.xlu0.b32.cont [7/16] 0.0, 128
        %670 = vxpose.xlu0.b32.cont [8/16] 0.0, 128
        %671 = vxpose.xlu0.b32.cont [9/16] 0.0, 128
        %672 = vxpose.xlu0.b32.cont [10/16] 0.0, 128
        %673 = vxpose.xlu0.b32.cont [11/16] 0.0, 128
        %674 = vxpose.xlu0.b32.cont [12/16] 0.0, 128
        %675 = vxpose.xlu0.b32.cont [13/16] 0.0, 128
        %676 = vxpose.xlu0.b32.cont [14/16] 0.0, 128
        %677 = vxpose.xlu0.b32.cont [15/16] 0.0, 128
        %678 = vxpose.xlu0.b32.end [16/16] 0.0, 128
        %v679 = vpop.trf.xlu0
        %v680 = vpop.trf.xlu0
        %v681 = vpop.trf.xlu0
        %v682 = vpop.trf.xlu0
        %v683 = vpop.trf.xlu0
        %v684 = vpop.trf.xlu0
        %v685 = vpop.trf.xlu0
        %v686 = vpop.trf.xlu0
        %v687 = vpop.trf.xlu0
        %v688 = vpop.trf.xlu0
        %v689 = vpop.trf.xlu0
        %v690 = vpop.trf.xlu0
        %v691 = vpop.trf.xlu0
        %v692 = vpop.trf.xlu0
        %v693 = vpop.trf.xlu0
        %v694 = vpop.trf.xlu0
        %695 = vxpose.xlu0.b32.start [1/16] %v411, 128
        %696 = vxpose.xlu0.b32.cont [2/16] 0.0, 128
        %697 = vxpose.xlu0.b32.cont [3/16] 0.0, 128
        %698 = vxpose.xlu0.b32.cont [4/16] 0.0, 128
        %699 = vxpose.xlu0.b32.cont [5/16] 0.0, 128
        %700 = vxpose.xlu0.b32.cont [6/16] 0.0, 128
        %701 = vxpose.xlu0.b32.cont [7/16] 0.0, 128
        %702 = vxpose.xlu0.b32.cont [8/16] 0.0, 128
        %703 = vxpose.xlu0.b32.cont [9/16] 0.0, 128
        %704 = vxpose.xlu0.b32.cont [10/16] 0.0, 128
        %705 = vxpose.xlu0.b32.cont [11/16] 0.0, 128
        %706 = vxpose.xlu0.b32.cont [12/16] 0.0, 128
        %707 = vxpose.xlu0.b32.cont [13/16] 0.0, 128
        %708 = vxpose.xlu0.b32.cont [14/16] 0.0, 128
        %709 = vxpose.xlu0.b32.cont [15/16] 0.0, 128
        %710 = vxpose.xlu0.b32.end [16/16] 0.0, 128
        %v711 = vpop.trf.xlu0
        %v712 = vpop.trf.xlu0
        %v713 = vpop.trf.xlu0
        %v714 = vpop.trf.xlu0
        %v715 = vpop.trf.xlu0
        %v716 = vpop.trf.xlu0
        %v717 = vpop.trf.xlu0
        %v718 = vpop.trf.xlu0
        %v719 = vpop.trf.xlu0
        %v720 = vpop.trf.xlu0
        %v721 = vpop.trf.xlu0
        %v722 = vpop.trf.xlu0
        %v723 = vpop.trf.xlu0
        %v724 = vpop.trf.xlu0
        %v725 = vpop.trf.xlu0
        %v726 = vpop.trf.xlu0
        %727 = vxpose.xlu0.b32.start [1/16] %v435, 128
        %728 = vxpose.xlu0.b32.cont [2/16] 0.0, 128
        %729 = vxpose.xlu0.b32.cont [3/16] 0.0, 128
        %730 = vxpose.xlu0.b32.cont [4/16] 0.0, 128
        %731 = vxpose.xlu0.b32.cont [5/16] 0.0, 128
        %732 = vxpose.xlu0.b32.cont [6/16] 0.0, 128
        %733 = vxpose.xlu0.b32.cont [7/16] 0.0, 128
        %734 = vxpose.xlu0.b32.cont [8/16] 0.0, 128
        %735 = vxpose.xlu0.b32.cont [9/16] 0.0, 128
        %736 = vxpose.xlu0.b32.cont [10/16] 0.0, 128
        %737 = vxpose.xlu0.b32.cont [11/16] 0.0, 128
        %738 = vxpose.xlu0.b32.cont [12/16] 0.0, 128
        %739 = vxpose.xlu0.b32.cont [13/16] 0.0, 128
        %740 = vxpose.xlu0.b32.cont [14/16] 0.0, 128
        %741 = vxpose.xlu0.b32.cont [15/16] 0.0, 128
        %742 = vxpose.xlu0.b32.end [16/16] 0.0, 128
        %v743 = vpop.trf.xlu0
        %v744 = vpop.trf.xlu0
        %v745 = vpop.trf.xlu0
        %v746 = vpop.trf.xlu0
        %v747 = vpop.trf.xlu0
        %v748 = vpop.trf.xlu0
        %v749 = vpop.trf.xlu0
        %v750 = vpop.trf.xlu0
        %v751 = vpop.trf.xlu0
        %v752 = vpop.trf.xlu0
        %v753 = vpop.trf.xlu0
        %v754 = vpop.trf.xlu0
        %v755 = vpop.trf.xlu0
        %v756 = vpop.trf.xlu0
        %v757 = vpop.trf.xlu0
        %v758 = vpop.trf.xlu0
        %759 = vxpose.xlu0.b32.start [1/16] %v418, 128
        %760 = vxpose.xlu0.b32.cont [2/16] 0.0, 128
        %761 = vxpose.xlu0.b32.cont [3/16] 0.0, 128
        %762 = vxpose.xlu0.b32.cont [4/16] 0.0, 128
        %763 = vxpose.xlu0.b32.cont [5/16] 0.0, 128
        %764 = vxpose.xlu0.b32.cont [6/16] 0.0, 128
        %765 = vxpose.xlu0.b32.cont [7/16] 0.0, 128
        %766 = vxpose.xlu0.b32.cont [8/16] 0.0, 128
        %767 = vxpose.xlu0.b32.cont [9/16] 0.0, 128
        %768 = vxpose.xlu0.b32.cont [10/16] 0.0, 128
        %769 = vxpose.xlu0.b32.cont [11/16] 0.0, 128
        %770 = vxpose.xlu0.b32.cont [12/16] 0.0, 128
        %771 = vxpose.xlu0.b32.cont [13/16] 0.0, 128
        %772 = vxpose.xlu0.b32.cont [14/16] 0.0, 128
        %773 = vxpose.xlu0.b32.cont [15/16] 0.0, 128
        %774 = vxpose.xlu0.b32.end [16/16] 0.0, 128
        %v775 = vpop.trf.xlu0
        %v776 = vpop.trf.xlu0
        %v777 = vpop.trf.xlu0
        %v778 = vpop.trf.xlu0
        %v779 = vpop.trf.xlu0
        %v780 = vpop.trf.xlu0
        %v781 = vpop.trf.xlu0
        %v782 = vpop.trf.xlu0
        %v783 = vpop.trf.xlu0
        %v784 = vpop.trf.xlu0
        %v785 = vpop.trf.xlu0
        %v786 = vpop.trf.xlu0
        %v787 = vpop.trf.xlu0
        %v788 = vpop.trf.xlu0
        %v789 = vpop.trf.xlu0
        %v790 = vpop.trf.xlu0
        %791 = vxpose.xlu0.b32.start [1/16] %v436, 128
        %792 = vxpose.xlu0.b32.cont [2/16] 0.0, 128
        %793 = vxpose.xlu0.b32.cont [3/16] 0.0, 128
        %794 = vxpose.xlu0.b32.cont [4/16] 0.0, 128
        %795 = vxpose.xlu0.b32.cont [5/16] 0.0, 128
        %796 = vxpose.xlu0.b32.cont [6/16] 0.0, 128
        %797 = vxpose.xlu0.b32.cont [7/16] 0.0, 128
        %798 = vxpose.xlu0.b32.cont [8/16] 0.0, 128
        %799 = vxpose.xlu0.b32.cont [9/16] 0.0, 128
        %800 = vxpose.xlu0.b32.cont [10/16] 0.0, 128
        %801 = vxpose.xlu0.b32.cont [11/16] 0.0, 128
        %802 = vxpose.xlu0.b32.cont [12/16] 0.0, 128
        %803 = vxpose.xlu0.b32.cont [13/16] 0.0, 128
        %804 = vxpose.xlu0.b32.cont [14/16] 0.0, 128
        %805 = vxpose.xlu0.b32.cont [15/16] 0.0, 128
        %806 = vxpose.xlu0.b32.end [16/16] 0.0, 128
        %v807 = vpop.trf.xlu0
        %v808 = vpop.trf.xlu0
        %v809 = vpop.trf.xlu0
        %v810 = vpop.trf.xlu0
        %v811 = vpop.trf.xlu0
        %v812 = vpop.trf.xlu0
        %v813 = vpop.trf.xlu0
        %v814 = vpop.trf.xlu0
        %v815 = vpop.trf.xlu0
        %v816 = vpop.trf.xlu0
        %v817 = vpop.trf.xlu0
        %v818 = vpop.trf.xlu0
        %v819 = vpop.trf.xlu0
        %v820 = vpop.trf.xlu0
        %v821 = vpop.trf.xlu0
        %v822 = vpop.trf.xlu0
        %823 = vxpose.xlu0.b32.start [1/16] %v427, 128
        %824 = vxpose.xlu0.b32.cont [2/16] 0.0, 128
        %825 = vxpose.xlu0.b32.cont [3/16] 0.0, 128
        %826 = vxpose.xlu0.b32.cont [4/16] 0.0, 128
        %827 = vxpose.xlu0.b32.cont [5/16] 0.0, 128
        %828 = vxpose.xlu0.b32.cont [6/16] 0.0, 128
        %829 = vxpose.xlu0.b32.cont [7/16] 0.0, 128
        %830 = vxpose.xlu0.b32.cont [8/16] 0.0, 128
        %831 = vxpose.xlu0.b32.cont [9/16] 0.0, 128
        %832 = vxpose.xlu0.b32.cont [10/16] 0.0, 128
        %833 = vxpose.xlu0.b32.cont [11/16] 0.0, 128
        %834 = vxpose.xlu0.b32.cont [12/16] 0.0, 128
        %835 = vxpose.xlu0.b32.cont [13/16] 0.0, 128
        %836 = vxpose.xlu0.b32.cont [14/16] 0.0, 128
        %837 = vxpose.xlu0.b32.cont [15/16] 0.0, 128
        %838 = vxpose.xlu0.b32.end [16/16] 0.0, 128
        %v839 = vpop.trf.xlu0
        %v840 = vpop.trf.xlu0
        %v841 = vpop.trf.xlu0
        %v842 = vpop.trf.xlu0
        %v843 = vpop.trf.xlu0
        %v844 = vpop.trf.xlu0
        %v845 = vpop.trf.xlu0
        %v846 = vpop.trf.xlu0
        %v847 = vpop.trf.xlu0
        %v848 = vpop.trf.xlu0
        %v849 = vpop.trf.xlu0
        %v850 = vpop.trf.xlu0
        %v851 = vpop.trf.xlu0
        %v852 = vpop.trf.xlu0
        %v853 = vpop.trf.xlu0
        %v854 = vpop.trf.xlu0
        %855 = vxpose.xlu0.b32.start [1/16] %v437, 128
        %856 = vxpose.xlu0.b32.cont [2/16] 0.0, 128
        %857 = vxpose.xlu0.b32.cont [3/16] 0.0, 128
        %858 = vxpose.xlu0.b32.cont [4/16] 0.0, 128
        %859 = vxpose.xlu0.b32.cont [5/16] 0.0, 128
        %860 = vxpose.xlu0.b32.cont [6/16] 0.0, 128
        %861 = vxpose.xlu0.b32.cont [7/16] 0.0, 128
        %862 = vxpose.xlu0.b32.cont [8/16] 0.0, 128
        %863 = vxpose.xlu0.b32.cont [9/16] 0.0, 128
        %864 = vxpose.xlu0.b32.cont [10/16] 0.0, 128
        %865 = vxpose.xlu0.b32.cont [11/16] 0.0, 128
        %866 = vxpose.xlu0.b32.cont [12/16] 0.0, 128
        %867 = vxpose.xlu0.b32.cont [13/16] 0.0, 128
        %868 = vxpose.xlu0.b32.cont [14/16] 0.0, 128
        %869 = vxpose.xlu0.b32.cont [15/16] 0.0, 128
        %870 = vxpose.xlu0.b32.end [16/16] 0.0, 128
        %v871 = vpop.trf.xlu0
        %v872 = vpop.trf.xlu0
        %v873 = vpop.trf.xlu0
        %v874 = vpop.trf.xlu0
        %v875 = vpop.trf.xlu0
        %v876 = vpop.trf.xlu0
        %v877 = vpop.trf.xlu0
        %v878 = vpop.trf.xlu0
        %v879 = vpop.trf.xlu0
        %v880 = vpop.trf.xlu0
        %v881 = vpop.trf.xlu0
        %v882 = vpop.trf.xlu0
        %v883 = vpop.trf.xlu0
        %v884 = vpop.trf.xlu0
        %v885 = vpop.trf.xlu0
        %v886 = vpop.trf.xlu0
        %887 = vxpose.xlu0.b32.start [1/16] %v434, 128
        %888 = vxpose.xlu0.b32.cont [2/16] 0.0, 128
        %889 = vxpose.xlu0.b32.cont [3/16] 0.0, 128
        %890 = vxpose.xlu0.b32.cont [4/16] 0.0, 128
        %891 = vxpose.xlu0.b32.cont [5/16] 0.0, 128
        %892 = vxpose.xlu0.b32.cont [6/16] 0.0, 128
        %893 = vxpose.xlu0.b32.cont [7/16] 0.0, 128
        %894 = vxpose.xlu0.b32.cont [8/16] 0.0, 128
        %895 = vxpose.xlu0.b32.cont [9/16] 0.0, 128
        %896 = vxpose.xlu0.b32.cont [10/16] 0.0, 128
        %897 = vxpose.xlu0.b32.cont [11/16] 0.0, 128
        %898 = vxpose.xlu0.b32.cont [12/16] 0.0, 128
        %899 = vxpose.xlu0.b32.cont [13/16] 0.0, 128
        %900 = vxpose.xlu0.b32.cont [14/16] 0.0, 128
        %901 = vxpose.xlu0.b32.cont [15/16] 0.0, 128
        %902 = vxpose.xlu0.b32.end [16/16] 0.0, 128
        %v903 = vpop.trf.xlu0
        %v904 = vpop.trf.xlu0
        %v905 = vpop.trf.xlu0
        %v906 = vpop.trf.xlu0
        %v907 = vpop.trf.xlu0
        %v908 = vpop.trf.xlu0
        %v909 = vpop.trf.xlu0
        %v910 = vpop.trf.xlu0
        %v911 = vpop.trf.xlu0
        %v912 = vpop.trf.xlu0
        %v913 = vpop.trf.xlu0
        %v914 = vpop.trf.xlu0
        %v915 = vpop.trf.xlu0
        %v916 = vpop.trf.xlu0
        %v917 = vpop.trf.xlu0
        %v918 = vpop.trf.xlu0
        %919 = vxpose.xlu0.b32.start [1/16] %v438, 128
        %920 = vxpose.xlu0.b32.cont [2/16] 0.0, 128
        %921 = vxpose.xlu0.b32.cont [3/16] 0.0, 128
        %922 = vxpose.xlu0.b32.cont [4/16] 0.0, 128
        %923 = vxpose.xlu0.b32.cont [5/16] 0.0, 128
        %924 = vxpose.xlu0.b32.cont [6/16] 0.0, 128
        %925 = vxpose.xlu0.b32.cont [7/16] 0.0, 128
        %926 = vxpose.xlu0.b32.cont [8/16] 0.0, 128
        %927 = vxpose.xlu0.b32.cont [9/16] 0.0, 128
        %928 = vxpose.xlu0.b32.cont [10/16] 0.0, 128
        %929 = vxpose.xlu0.b32.cont [11/16] 0.0, 128
        %930 = vxpose.xlu0.b32.cont [12/16] 0.0, 128
        %931 = vxpose.xlu0.b32.cont [13/16] 0.0, 128
        %932 = vxpose.xlu0.b32.cont [14/16] 0.0, 128
        %933 = vxpose.xlu0.b32.cont [15/16] 0.0, 128
        %934 = vxpose.xlu0.b32.end [16/16] 0.0, 128
        %v935 = vpop.trf.xlu0
        %v936 = vpop.trf.xlu0
        %v937 = vpop.trf.xlu0
        %v938 = vpop.trf.xlu0
        %v939 = vpop.trf.xlu0
        %v940 = vpop.trf.xlu0
        %v941 = vpop.trf.xlu0
        %v942 = vpop.trf.xlu0
        %v943 = vpop.trf.xlu0
        %v944 = vpop.trf.xlu0
        %v945 = vpop.trf.xlu0
        %v946 = vpop.trf.xlu0
        %v947 = vpop.trf.xlu0
        %v948 = vpop.trf.xlu0
        %v949 = vpop.trf.xlu0
        %v950 = vpop.trf.xlu0
        %v951 = vcombine.low %v455, %v519
        %v952 = vcombine.high %v455, %v519
        %v954 = vunpack.c.l.s4 1983009808
        %v955 = vunpack.c.0.s8 %v954
        %v956 = vlaneseq
        %v957 = vshrl.u32 %v956, 7
        %v958 = vsub.s32 %v955, %v957
        %v959 = vrot.slane %v951, %v958
        %v961 = vunpack.c.l.s4 1983009808
        %v962 = vunpack.c.0.s8 %v961
        %v963 = vlaneseq
        %v964 = vshrl.u32 %v963, 7
        %v965 = vsub.s32 %v962, %v964
        %v966 = vrot.slane %v952, %v965
        %v967 = vcombine.low %v487, %v551
        %v968 = vcombine.high %v487, %v551
        %v970 = vunpack.c.l.s4 1983009808
        %v971 = vunpack.c.0.s8 %v970
        %v972 = vlaneseq
        %v973 = vshrl.u32 %v972, 7
        %v974 = vsub.s32 %v971, %v973
        %v975 = vrot.slane %v967, %v974
        %v977 = vunpack.c.l.s4 1983009808
        %v978 = vunpack.c.0.s8 %v977
        %v979 = vlaneseq
        %v980 = vshrl.u32 %v979, 7
        %v981 = vsub.s32 %v978, %v980
        %v982 = vrot.slane %v968, %v981
        %v983 = vcombine.low %v583, %v647
        %v984 = vcombine.high %v583, %v647
        %v986 = vunpack.c.l.s4 1983009808
        %v987 = vunpack.c.0.s8 %v986
        %v988 = vlaneseq
        %v989 = vshrl.u32 %v988, 7
        %v990 = vsub.s32 %v987, %v989
        %v991 = vrot.slane %v983, %v990
        %v993 = vunpack.c.l.s4 1983009808
        %v994 = vunpack.c.0.s8 %v993
        %v995 = vlaneseq
        %v996 = vshrl.u32 %v995, 7
        %v997 = vsub.s32 %v994, %v996
        %v998 = vrot.slane %v984, %v997
        %v999 = vcombine.low %v615, %v679
        %v1000 = vcombine.high %v615, %v679
        %v1002 = vunpack.c.l.s4 1983009808
        %v1003 = vunpack.c.0.s8 %v1002
        %v1004 = vlaneseq
        %v1005 = vshrl.u32 %v1004, 7
        %v1006 = vsub.s32 %v1003, %v1005
        %v1007 = vrot.slane %v999, %v1006
        %v1009 = vunpack.c.l.s4 1983009808
        %v1010 = vunpack.c.0.s8 %v1009
        %v1011 = vlaneseq
        %v1012 = vshrl.u32 %v1011, 7
        %v1013 = vsub.s32 %v1010, %v1012
        %v1014 = vrot.slane %v1000, %v1013
        %v1015 = vcombine.low %v959, %v975
        %v1016 = vcombine.high %v959, %v975
        %v1018 = vunpack.c.l.s4 1934713408
        %v1019 = vunpack.c.0.s8 %v1018
        %v1020 = vlaneseq
        %v1021 = vshrl.u32 %v1020, 7
        %v1022 = vsub.s32 %v1019, %v1021
        %v1023 = vrot.slane %v1015, %v1022
        %v1025 = vunpack.c.l.s4 1934713408
        %v1026 = vunpack.c.0.s8 %v1025
        %v1027 = vlaneseq
        %v1028 = vshrl.u32 %v1027, 7
        %v1029 = vsub.s32 %v1026, %v1028
        %v1030 = vrot.slane %v1016, %v1029
        %v1031 = vcombine.low %v966, %v982
        %v1032 = vcombine.high %v966, %v982
        %v1034 = vunpack.c.l.s4 1934713408
        %v1035 = vunpack.c.0.s8 %v1034
        %v1036 = vlaneseq
        %v1037 = vshrl.u32 %v1036, 7
        %v1038 = vsub.s32 %v1035, %v1037
        %v1039 = vrot.slane %v1031, %v1038
        %v1041 = vunpack.c.l.s4 1934713408
        %v1042 = vunpack.c.0.s8 %v1041
        %v1043 = vlaneseq
        %v1044 = vshrl.u32 %v1043, 7
        %v1045 = vsub.s32 %v1042, %v1044
        %v1046 = vrot.slane %v1032, %v1045
        %v1047 = vcombine.low %v991, %v1007
        %v1048 = vcombine.high %v991, %v1007
        %v1050 = vunpack.c.l.s4 1934713408
        %v1051 = vunpack.c.0.s8 %v1050
        %v1052 = vlaneseq
        %v1053 = vshrl.u32 %v1052, 7
        %v1054 = vsub.s32 %v1051, %v1053
        %v1055 = vrot.slane %v1047, %v1054
        %v1057 = vunpack.c.l.s4 1934713408
        %v1058 = vunpack.c.0.s8 %v1057
        %v1059 = vlaneseq
        %v1060 = vshrl.u32 %v1059, 7
        %v1061 = vsub.s32 %v1058, %v1060
        %v1062 = vrot.slane %v1048, %v1061
        %v1063 = vcombine.low %v998, %v1014
        %v1064 = vcombine.high %v998, %v1014
        %v1066 = vunpack.c.l.s4 1934713408
        %v1067 = vunpack.c.0.s8 %v1066
        %v1068 = vlaneseq
        %v1069 = vshrl.u32 %v1068, 7
        %v1070 = vsub.s32 %v1067, %v1069
        %v1071 = vrot.slane %v1063, %v1070
        %v1073 = vunpack.c.l.s4 1934713408
        %v1074 = vunpack.c.0.s8 %v1073
        %v1075 = vlaneseq
        %v1076 = vshrl.u32 %v1075, 7
        %v1077 = vsub.s32 %v1074, %v1076
        %v1078 = vrot.slane %v1064, %v1077
        %v1079 = vcombine.low %v1023, %v1055
        %v1080 = vcombine.high %v1023, %v1055
        %v1081 = vcombine.low %v1030, %v1062
        %v1082 = vcombine.high %v1030, %v1062
        %v1083 = vcombine.low %v1039, %v1071
        %v1084 = vcombine.high %v1039, %v1071
        %v1085 = vcombine.low %v1046, %v1078
        %v1086 = vcombine.high %v1046, %v1078
        %v1087 = vcombine.low %v711, %v775
        %v1088 = vcombine.high %v711, %v775
        %v1090 = vunpack.c.l.s4 1983009808
        %v1091 = vunpack.c.0.s8 %v1090
        %v1092 = vlaneseq
        %v1093 = vshrl.u32 %v1092, 7
        %v1094 = vsub.s32 %v1091, %v1093
        %v1095 = vrot.slane %v1087, %v1094
        %v1097 = vunpack.c.l.s4 1983009808
        %v1098 = vunpack.c.0.s8 %v1097
        %v1099 = vlaneseq
        %v1100 = vshrl.u32 %v1099, 7
        %v1101 = vsub.s32 %v1098, %v1100
        %v1102 = vrot.slane %v1088, %v1101
        %v1103 = vcombine.low %v743, %v807
        %v1104 = vcombine.high %v743, %v807
        %v1106 = vunpack.c.l.s4 1983009808
        %v1107 = vunpack.c.0.s8 %v1106
        %v1108 = vlaneseq
        %v1109 = vshrl.u32 %v1108, 7
        %v1110 = vsub.s32 %v1107, %v1109
        %v1111 = vrot.slane %v1103, %v1110
        %v1113 = vunpack.c.l.s4 1983009808
        %v1114 = vunpack.c.0.s8 %v1113
        %v1115 = vlaneseq
        %v1116 = vshrl.u32 %v1115, 7
        %v1117 = vsub.s32 %v1114, %v1116
        %v1118 = vrot.slane %v1104, %v1117
        %v1119 = vcombine.low %v839, %v903
        %v1120 = vcombine.high %v839, %v903
        %v1122 = vunpack.c.l.s4 1983009808
        %v1123 = vunpack.c.0.s8 %v1122
        %v1124 = vlaneseq
        %v1125 = vshrl.u32 %v1124, 7
        %v1126 = vsub.s32 %v1123, %v1125
        %v1127 = vrot.slane %v1119, %v1126
        %v1129 = vunpack.c.l.s4 1983009808
        %v1130 = vunpack.c.0.s8 %v1129
        %v1131 = vlaneseq
        %v1132 = vshrl.u32 %v1131, 7
        %v1133 = vsub.s32 %v1130, %v1132
        %v1134 = vrot.slane %v1120, %v1133
        %v1135 = vcombine.low %v871, %v935
        %v1136 = vcombine.high %v871, %v935
        %v1138 = vunpack.c.l.s4 1983009808
        %v1139 = vunpack.c.0.s8 %v1138
        %v1140 = vlaneseq
        %v1141 = vshrl.u32 %v1140, 7
        %v1142 = vsub.s32 %v1139, %v1141
        %v1143 = vrot.slane %v1135, %v1142
        %v1145 = vunpack.c.l.s4 1983009808
        %v1146 = vunpack.c.0.s8 %v1145
        %v1147 = vlaneseq
        %v1148 = vshrl.u32 %v1147, 7
        %v1149 = vsub.s32 %v1146, %v1148
        %v1150 = vrot.slane %v1136, %v1149
        %v1151 = vcombine.low %v1095, %v1111
        %v1152 = vcombine.high %v1095, %v1111
        %v1154 = vunpack.c.l.s4 1934713408
        %v1155 = vunpack.c.0.s8 %v1154
        %v1156 = vlaneseq
        %v1157 = vshrl.u32 %v1156, 7
        %v1158 = vsub.s32 %v1155, %v1157
        %v1159 = vrot.slane %v1151, %v1158
        %v1161 = vunpack.c.l.s4 1934713408
        %v1162 = vunpack.c.0.s8 %v1161
        %v1163 = vlaneseq
        %v1164 = vshrl.u32 %v1163, 7
        %v1165 = vsub.s32 %v1162, %v1164
        %v1166 = vrot.slane %v1152, %v1165
        %v1167 = vcombine.low %v1102, %v1118
        %v1168 = vcombine.high %v1102, %v1118
        %v1170 = vunpack.c.l.s4 1934713408
        %v1171 = vunpack.c.0.s8 %v1170
        %v1172 = vlaneseq
        %v1173 = vshrl.u32 %v1172, 7
        %v1174 = vsub.s32 %v1171, %v1173
        %v1175 = vrot.slane %v1167, %v1174
        %v1177 = vunpack.c.l.s4 1934713408
        %v1178 = vunpack.c.0.s8 %v1177
        %v1179 = vlaneseq
        %v1180 = vshrl.u32 %v1179, 7
        %v1181 = vsub.s32 %v1178, %v1180
        %v1182 = vrot.slane %v1168, %v1181
        %v1183 = vcombine.low %v1127, %v1143
        %v1184 = vcombine.high %v1127, %v1143
        %v1186 = vunpack.c.l.s4 1934713408
        %v1187 = vunpack.c.0.s8 %v1186
        %v1188 = vlaneseq
        %v1189 = vshrl.u32 %v1188, 7
        %v1190 = vsub.s32 %v1187, %v1189
        %v1191 = vrot.slane %v1183, %v1190
        %v1193 = vunpack.c.l.s4 1934713408
        %v1194 = vunpack.c.0.s8 %v1193
        %v1195 = vlaneseq
        %v1196 = vshrl.u32 %v1195, 7
        %v1197 = vsub.s32 %v1194, %v1196
        %v1198 = vrot.slane %v1184, %v1197
        %v1199 = vcombine.low %v1134, %v1150
        %v1200 = vcombine.high %v1134, %v1150
        %v1202 = vunpack.c.l.s4 1934713408
        %v1203 = vunpack.c.0.s8 %v1202
        %v1204 = vlaneseq
        %v1205 = vshrl.u32 %v1204, 7
        %v1206 = vsub.s32 %v1203, %v1205
        %v1207 = vrot.slane %v1199, %v1206
        %v1209 = vunpack.c.l.s4 1934713408
        %v1210 = vunpack.c.0.s8 %v1209
        %v1211 = vlaneseq
        %v1212 = vshrl.u32 %v1211, 7
        %v1213 = vsub.s32 %v1210, %v1212
        %v1214 = vrot.slane %v1200, %v1213
        %v1215 = vcombine.low %v1159, %v1191
        %v1216 = vcombine.high %v1159, %v1191
        %v1217 = vcombine.low %v1166, %v1198
        %v1218 = vcombine.high %v1166, %v1198
        %v1219 = vcombine.low %v1175, %v1207
        %v1220 = vcombine.high %v1175, %v1207
        %v1221 = vcombine.low %v1182, %v1214
        %v1222 = vcombine.high %v1182, %v1214
        %v1223 = vcombine.low %v456, %v520
        %v1224 = vcombine.high %v456, %v520
        %v1226 = vunpack.c.l.s4 1983009808
        %v1227 = vunpack.c.0.s8 %v1226
        %v1228 = vlaneseq
        %v1229 = vshrl.u32 %v1228, 7
        %v1230 = vsub.s32 %v1227, %v1229
        %v1231 = vrot.slane %v1223, %v1230
        %v1233 = vunpack.c.l.s4 1983009808
        %v1234 = vunpack.c.0.s8 %v1233
        %v1235 = vlaneseq
        %v1236 = vshrl.u32 %v1235, 7
        %v1237 = vsub.s32 %v1234, %v1236
        %v1238 = vrot.slane %v1224, %v1237
        %v1239 = vcombine.low %v488, %v552
        %v1240 = vcombine.high %v488, %v552
        %v1242 = vunpack.c.l.s4 1983009808
        %v1243 = vunpack.c.0.s8 %v1242
        %v1244 = vlaneseq
        %v1245 = vshrl.u32 %v1244, 7
        %v1246 = vsub.s32 %v1243, %v1245
        %v1247 = vrot.slane %v1239, %v1246
        %v1249 = vunpack.c.l.s4 1983009808
        %v1250 = vunpack.c.0.s8 %v1249
        %v1251 = vlaneseq
        %v1252 = vshrl.u32 %v1251, 7
        %v1253 = vsub.s32 %v1250, %v1252
        %v1254 = vrot.slane %v1240, %v1253
        %v1255 = vcombine.low %v584, %v648
        %v1256 = vcombine.high %v584, %v648
        %v1258 = vunpack.c.l.s4 1983009808
        %v1259 = vunpack.c.0.s8 %v1258
        %v1260 = vlaneseq
        %v1261 = vshrl.u32 %v1260, 7
        %v1262 = vsub.s32 %v1259, %v1261
        %v1263 = vrot.slane %v1255, %v1262
        %v1265 = vunpack.c.l.s4 1983009808
        %v1266 = vunpack.c.0.s8 %v1265
        %v1267 = vlaneseq
        %v1268 = vshrl.u32 %v1267, 7
        %v1269 = vsub.s32 %v1266, %v1268
        %v1270 = vrot.slane %v1256, %v1269
        %v1271 = vcombine.low %v616, %v680
        %v1272 = vcombine.high %v616, %v680
        %v1274 = vunpack.c.l.s4 1983009808
        %v1275 = vunpack.c.0.s8 %v1274
        %v1276 = vlaneseq
        %v1277 = vshrl.u32 %v1276, 7
        %v1278 = vsub.s32 %v1275, %v1277
        %v1279 = vrot.slane %v1271, %v1278
        %v1281 = vunpack.c.l.s4 1983009808
        %v1282 = vunpack.c.0.s8 %v1281
        %v1283 = vlaneseq
        %v1284 = vshrl.u32 %v1283, 7
        %v1285 = vsub.s32 %v1282, %v1284
        %v1286 = vrot.slane %v1272, %v1285
        %v1287 = vcombine.low %v1231, %v1247
        %v1288 = vcombine.high %v1231, %v1247
        %v1290 = vunpack.c.l.s4 1934713408
        %v1291 = vunpack.c.0.s8 %v1290
        %v1292 = vlaneseq
        %v1293 = vshrl.u32 %v1292, 7
        %v1294 = vsub.s32 %v1291, %v1293
        %v1295 = vrot.slane %v1287, %v1294
        %v1297 = vunpack.c.l.s4 1934713408
        %v1298 = vunpack.c.0.s8 %v1297
        %v1299 = vlaneseq
        %v1300 = vshrl.u32 %v1299, 7
        %v1301 = vsub.s32 %v1298, %v1300
        %v1302 = vrot.slane %v1288, %v1301
        %v1303 = vcombine.low %v1238, %v1254
        %v1304 = vcombine.high %v1238, %v1254
        %v1306 = vunpack.c.l.s4 1934713408
        %v1307 = vunpack.c.0.s8 %v1306
        %v1308 = vlaneseq
        %v1309 = vshrl.u32 %v1308, 7
        %v1310 = vsub.s32 %v1307, %v1309
        %v1311 = vrot.slane %v1303, %v1310
        %v1313 = vunpack.c.l.s4 1934713408
        %v1314 = vunpack.c.0.s8 %v1313
        %v1315 = vlaneseq
        %v1316 = vshrl.u32 %v1315, 7
        %v1317 = vsub.s32 %v1314, %v1316
        %v1318 = vrot.slane %v1304, %v1317
        %v1319 = vcombine.low %v1263, %v1279
        %v1320 = vcombine.high %v1263, %v1279
        %v1322 = vunpack.c.l.s4 1934713408
        %v1323 = vunpack.c.0.s8 %v1322
        %v1324 = vlaneseq
        %v1325 = vshrl.u32 %v1324, 7
        %v1326 = vsub.s32 %v1323, %v1325
        %v1327 = vrot.slane %v1319, %v1326
        %v1329 = vunpack.c.l.s4 1934713408
        %v1330 = vunpack.c.0.s8 %v1329
        %v1331 = vlaneseq
        %v1332 = vshrl.u32 %v1331, 7
        %v1333 = vsub.s32 %v1330, %v1332
        %v1334 = vrot.slane %v1320, %v1333
        %v1335 = vcombine.low %v1270, %v1286
        %v1336 = vcombine.high %v1270, %v1286
        %v1338 = vunpack.c.l.s4 1934713408
        %v1339 = vunpack.c.0.s8 %v1338
        %v1340 = vlaneseq
        %v1341 = vshrl.u32 %v1340, 7
        %v1342 = vsub.s32 %v1339, %v1341
        %v1343 = vrot.slane %v1335, %v1342
        %v1345 = vunpack.c.l.s4 1934713408
        %v1346 = vunpack.c.0.s8 %v1345
        %v1347 = vlaneseq
        %v1348 = vshrl.u32 %v1347, 7
        %v1349 = vsub.s32 %v1346, %v1348
        %v1350 = vrot.slane %v1336, %v1349
        %v1351 = vcombine.low %v1295, %v1327
        %v1352 = vcombine.high %v1295, %v1327
        %v1353 = vcombine.low %v1302, %v1334
        %v1354 = vcombine.high %v1302, %v1334
        %v1355 = vcombine.low %v1311, %v1343
        %v1356 = vcombine.high %v1311, %v1343
        %v1357 = vcombine.low %v1318, %v1350
        %v1358 = vcombine.high %v1318, %v1350
        %v1359 = vcombine.low %v712, %v776
        %v1360 = vcombine.high %v712, %v776
        %v1362 = vunpack.c.l.s4 1983009808
        %v1363 = vunpack.c.0.s8 %v1362
        %v1364 = vlaneseq
        %v1365 = vshrl.u32 %v1364, 7
        %v1366 = vsub.s32 %v1363, %v1365
        %v1367 = vrot.slane %v1359, %v1366
        %v1369 = vunpack.c.l.s4 1983009808
        %v1370 = vunpack.c.0.s8 %v1369
        %v1371 = vlaneseq
        %v1372 = vshrl.u32 %v1371, 7
        %v1373 = vsub.s32 %v1370, %v1372
        %v1374 = vrot.slane %v1360, %v1373
        %v1375 = vcombine.low %v744, %v808
        %v1376 = vcombine.high %v744, %v808
        %v1378 = vunpack.c.l.s4 1983009808
        %v1379 = vunpack.c.0.s8 %v1378
        %v1380 = vlaneseq
        %v1381 = vshrl.u32 %v1380, 7
        %v1382 = vsub.s32 %v1379, %v1381
        %v1383 = vrot.slane %v1375, %v1382
        %v1385 = vunpack.c.l.s4 1983009808
        %v1386 = vunpack.c.0.s8 %v1385
        %v1387 = vlaneseq
        %v1388 = vshrl.u32 %v1387, 7
        %v1389 = vsub.s32 %v1386, %v1388
        %v1390 = vrot.slane %v1376, %v1389
        %v1391 = vcombine.low %v840, %v904
        %v1392 = vcombine.high %v840, %v904
        %v1394 = vunpack.c.l.s4 1983009808
        %v1395 = vunpack.c.0.s8 %v1394
        %v1396 = vlaneseq
        %v1397 = vshrl.u32 %v1396, 7
        %v1398 = vsub.s32 %v1395, %v1397
        %v1399 = vrot.slane %v1391, %v1398
        %v1401 = vunpack.c.l.s4 1983009808
        %v1402 = vunpack.c.0.s8 %v1401
        %v1403 = vlaneseq
        %v1404 = vshrl.u32 %v1403, 7
        %v1405 = vsub.s32 %v1402, %v1404
        %v1406 = vrot.slane %v1392, %v1405
        %v1407 = vcombine.low %v872, %v936
        %v1408 = vcombine.high %v872, %v936
        %v1410 = vunpack.c.l.s4 1983009808
        %v1411 = vunpack.c.0.s8 %v1410
        %v1412 = vlaneseq
        %v1413 = vshrl.u32 %v1412, 7
        %v1414 = vsub.s32 %v1411, %v1413
        %v1415 = vrot.slane %v1407, %v1414
        %v1417 = vunpack.c.l.s4 1983009808
        %v1418 = vunpack.c.0.s8 %v1417
        %v1419 = vlaneseq
        %v1420 = vshrl.u32 %v1419, 7
        %v1421 = vsub.s32 %v1418, %v1420
        %v1422 = vrot.slane %v1408, %v1421
        %v1423 = vcombine.low %v1367, %v1383
        %v1424 = vcombine.high %v1367, %v1383
        %v1426 = vunpack.c.l.s4 1934713408
        %v1427 = vunpack.c.0.s8 %v1426
        %v1428 = vlaneseq
        %v1429 = vshrl.u32 %v1428, 7
        %v1430 = vsub.s32 %v1427, %v1429
        %v1431 = vrot.slane %v1423, %v1430
        %v1433 = vunpack.c.l.s4 1934713408
        %v1434 = vunpack.c.0.s8 %v1433
        %v1435 = vlaneseq
        %v1436 = vshrl.u32 %v1435, 7
        %v1437 = vsub.s32 %v1434, %v1436
        %v1438 = vrot.slane %v1424, %v1437
        %v1439 = vcombine.low %v1374, %v1390
        %v1440 = vcombine.high %v1374, %v1390
        %v1442 = vunpack.c.l.s4 1934713408
        %v1443 = vunpack.c.0.s8 %v1442
        %v1444 = vlaneseq
        %v1445 = vshrl.u32 %v1444, 7
        %v1446 = vsub.s32 %v1443, %v1445
        %v1447 = vrot.slane %v1439, %v1446
        %v1449 = vunpack.c.l.s4 1934713408
        %v1450 = vunpack.c.0.s8 %v1449
        %v1451 = vlaneseq
        %v1452 = vshrl.u32 %v1451, 7
        %v1453 = vsub.s32 %v1450, %v1452
        %v1454 = vrot.slane %v1440, %v1453
        %v1455 = vcombine.low %v1399, %v1415
        %v1456 = vcombine.high %v1399, %v1415
        %v1458 = vunpack.c.l.s4 1934713408
        %v1459 = vunpack.c.0.s8 %v1458
        %v1460 = vlaneseq
        %v1461 = vshrl.u32 %v1460, 7
        %v1462 = vsub.s32 %v1459, %v1461
        %v1463 = vrot.slane %v1455, %v1462
        %v1465 = vunpack.c.l.s4 1934713408
        %v1466 = vunpack.c.0.s8 %v1465
        %v1467 = vlaneseq
        %v1468 = vshrl.u32 %v1467, 7
        %v1469 = vsub.s32 %v1466, %v1468
        %v1470 = vrot.slane %v1456, %v1469
        %v1471 = vcombine.low %v1406, %v1422
        %v1472 = vcombine.high %v1406, %v1422
        %v1474 = vunpack.c.l.s4 1934713408
        %v1475 = vunpack.c.0.s8 %v1474
        %v1476 = vlaneseq
        %v1477 = vshrl.u32 %v1476, 7
        %v1478 = vsub.s32 %v1475, %v1477
        %v1479 = vrot.slane %v1471, %v1478
        %v1481 = vunpack.c.l.s4 1934713408
        %v1482 = vunpack.c.0.s8 %v1481
        %v1483 = vlaneseq
        %v1484 = vshrl.u32 %v1483, 7
        %v1485 = vsub.s32 %v1482, %v1484
        %v1486 = vrot.slane %v1472, %v1485
        %v1487 = vcombine.low %v1431, %v1463
        %v1488 = vcombine.high %v1431, %v1463
        %v1489 = vcombine.low %v1438, %v1470
        %v1490 = vcombine.high %v1438, %v1470
        %v1491 = vcombine.low %v1447, %v1479
        %v1492 = vcombine.high %v1447, %v1479
        %v1493 = vcombine.low %v1454, %v1486
        %v1494 = vcombine.high %v1454, %v1486
        %vm1495 = vcmask 31744
        %1496 = vst.msk [vmem:[%s165] sm:$0xff] %vm1495, %v1079
        %1497 = vst.msk [vmem:[%s165 + $0x8] sm:$0xff] %vm1495, %v1215
        %1498 = vst.msk [vmem:[%s165 + $0x10] sm:$0xff] %vm1495, %v1080
        %1499 = vst.msk [vmem:[%s165 + $0x18] sm:$0xff] %vm1495, %v1216
        %1500 = vst.msk [vmem:[%s165 + $0x20] sm:$0xff] %vm1495, %v1081
        %1501 = vst.msk [vmem:[%s165 + $0x28] sm:$0xff] %vm1495, %v1217
        %1502 = vst.msk [vmem:[%s165 + $0x30] sm:$0xff] %vm1495, %v1082
        %1503 = vst.msk [vmem:[%s165 + $0x38] sm:$0xff] %vm1495, %v1218
        %1504 = vst.msk [vmem:[%s165 + $0x40] sm:$0xff] %vm1495, %v1083
        %1505 = vst.msk [vmem:[%s165 + $0x48] sm:$0xff] %vm1495, %v1219
        %1506 = vst.msk [vmem:[%s165 + $0x50] sm:$0xff] %vm1495, %v1084
        %1507 = vst.msk [vmem:[%s165 + $0x58] sm:$0xff] %vm1495, %v1220
        %1508 = vst.msk [vmem:[%s165 + $0x60] sm:$0xff] %vm1495, %v1085
        %1509 = vst.msk [vmem:[%s165 + $0x68] sm:$0xff] %vm1495, %v1221
        %1510 = vst.msk [vmem:[%s165 + $0x70] sm:$0xff] %vm1495, %v1086
        %1511 = vst.msk [vmem:[%s165 + $0x78] sm:$0xff] %vm1495, %v1222
        %1512 = vst.msk [vmem:[%s165 + $0x80] sm:$0xff] %vm1495, %v1351
        %1513 = vst.msk [vmem:[%s165 + $0x88] sm:$0xff] %vm1495, %v1487
        %1514 = vst.msk [vmem:[%s165 + $0x90] sm:$0xff] %vm1495, %v1352
        %1515 = vst.msk [vmem:[%s165 + $0x98] sm:$0xff] %vm1495, %v1488
        %1516 = vst.msk [vmem:[%s165 + $0xa0] sm:$0xff] %vm1495, %v1353
        %1517 = vst.msk [vmem:[%s165 + $0xa8] sm:$0xff] %vm1495, %v1489
        %1518 = vst.msk [vmem:[%s165 + $0xb0] sm:$0xff] %vm1495, %v1354
        %1519 = vst.msk [vmem:[%s165 + $0xb8] sm:$0xff] %vm1495, %v1490
        %1520 = vst.msk [vmem:[%s165 + $0xc0] sm:$0xff] %vm1495, %v1355
        %1521 = vst.msk [vmem:[%s165 + $0xc8] sm:$0xff] %vm1495, %v1491
        %1522 = vst.msk [vmem:[%s165 + $0xd0] sm:$0xff] %vm1495, %v1356
        %1523 = vst.msk [vmem:[%s165 + $0xd8] sm:$0xff] %vm1495, %v1492
        %1524 = vst.msk [vmem:[%s165 + $0xe0] sm:$0xff] %vm1495, %v1357
        %1525 = vst.msk [vmem:[%s165 + $0xe8] sm:$0xff] %vm1495, %v1493
        %1526 = vst.msk [vmem:[%s165 + $0xf0] sm:$0xff] %vm1495, %v1358
        %1527 = vst.msk [vmem:[%s165 + $0xf8] sm:$0xff] %vm1495, %v1494
        %s1528 = smul.u32 16, %s20
        %p1529 = scmp.lt.s32.totalorder %s19, 1
        %s1530 = scalar_select %p1529, %s19, 1
        %p1531 = scmp.lt.s32.totalorder %s1528, 15
        %s1532 = scalar_select %p1531, %s1528, 15
        %s1533 = smul.addr %s1532, 2
        %s1534 = smul.addr %s1530, 32
        %s1535 = sadd.s32 %s1533, %s1534
        %s1536 = smul.addr %s1535, 8
        %s1537 = scalar_lea.vmem %s1, %s1536
        // Predicated region
        $region29: #{tpu_custom_call.1} parent=23 // pred_check
          %p1538 = pneg %p75
        $region30: #{tpu_custom_call.1} parent=23 // pred_check_branch
          %1540 = sbr.rel (%p1538) target = $region32
        $region31: #{tpu_custom_call.1} parent=23 // pred_region
          %s1541 = smul.u32 16, %s20
        $region32: #{tpu_custom_call.1} parent=23 // pred_fallthru
          _
      $region24: #{tpu_custom_call.1} parent=5 // pred_fallthru
        _
      %p1542 = scmp.le.s32.totalorder 2, %s10
      // Predicated region
      $region33: #{tpu_custom_call.1} parent=5 // pred_check
        %p1543 = pneg %p1542
      $region34: #{tpu_custom_call.1} parent=5 // pred_check_branch
        %1545 = sbr.rel (%p1543) target = $region36
      $region35: #{tpu_custom_call.1} parent=5 // pred_region
        %s1546 = ssub.s32 %s10, 2
        // Predicated region
        $region37: #{tpu_custom_call.1} parent=35 // pred_check
          %p1547 = pneg %p81
        $region38: #{tpu_custom_call.1} parent=35 // pred_check_branch
          %1549 = sbr.rel (%p1547) target = $region40
        $region39: #{tpu_custom_call.1} parent=35 // pred_region
          %s1550 = smul.u32 16, %s22
          %p1551 = scmp.lt.s32.totalorder %s21, 1
          %s1552 = scalar_select %p1551, %s21, 1
          %p1553 = scmp.lt.s32.totalorder %s1550, 15
          %s1554 = scalar_select %p1553, %s1550, 15
          %s1555 = smul.addr %s1554, 2
          %s1556 = smul.addr %s1552, 32
          %s1557 = sadd.s32 %s1555, %s1556
          %s1558 = smul.addr %s1557, 8
          %s1559 = scalar_lea.vmem %s1, %s1558
        $region40: #{tpu_custom_call.1} parent=35 // pred_fallthru
          _
      $region36: #{tpu_custom_call.1} parent=5 // pred_fallthru
        _
    $region6: #{tpu_custom_call.1} parent=1 // loop_footer
      %s14 = sadd.s32 1, %s10
    $region7: #{tpu_custom_call.1} parent=1 // loop_footer_branch
      %9 = sbr.rel target = $region3
    $region8: #{tpu_custom_call.1} parent=1 // loop_exit
      _
    %1560 = vsyncpa [#allocation3], 1
    %s1561 = scalar_lea.sflag [#allocation3], 1
    %1562 = vsyncpa %s1561, 1

</llo_original>
